<compile_context>
chip_gen: v7x
topology: tpu7x:2x2x1
jax: 0.10.0
libtpu: 0.0.40
codegen_flags: <defaults>
</compile_context>

<pallas_src>
import functools

import jax
import jax.numpy as jnp
from jax.experimental import pallas as pl
from jax.experimental.pallas import tpu as pltpu

_MIB = 1024 * 1024


def _rmsnorm_kernel(x_ref, w_ref, o_ref, *, eps):
    # Promote to f32 for the variance computation (matches .to(torch.float32)).
    x = x_ref[...].astype(jnp.float32)
    var = jnp.mean(x * x, axis=-1, keepdims=True)
    inv = jax.lax.rsqrt(var + eps)               # EUP rsqrt; VPU/XLU have slack
    # Cast back to the input dtype BEFORE multiplying by weight (PyTorch order).
    y = (x * inv).astype(x_ref.dtype)
    # weight (already in the promoted compute dtype) * y; cast to output dtype.
    o_ref[...] = (w_ref[...] * y).astype(o_ref.dtype)


def _round_up(x, m):
    return ((x + m - 1) // m) * m


def _tpu_generation():
    try:
        kind = jax.devices()[0].device_kind.lower()
    except Exception:
        return "unknown"
    if "v5" in kind:
        return "v5e"
    if "v6" in kind:
        return "v6e"
    if "v7" in kind:
        return "v7x"
    return "unknown"


# Per-generation knobs: physical VMEM fallback, target HBM bytes per grid step.
_GEN_PARAMS = {
    "v5e":     dict(vmem_cap=128 * _MIB, hbm_step_target=8 * _MIB),
    "v6e":     dict(vmem_cap=128 * _MIB, hbm_step_target=16 * _MIB),
    "v7x":     dict(vmem_cap=64 * _MIB,  hbm_step_target=24 * _MIB),
    "unknown": dict(vmem_cap=64 * _MIB,  hbm_step_target=8 * _MIB),
}


def _vmem_params(gen):
    params = _GEN_PARAMS[gen]
    vmem_cap = params["vmem_cap"]
    try:
        info = pltpu.get_tpu_info()
        reported = int(getattr(info, "vmem_capacity_bytes", vmem_cap))
        if reported > 0:
            vmem_cap = reported
    except Exception:
        pass
    # v7x VMEM is 64 MiB *per TensorCore*; guard against a per-chip report.
    if gen == "v7x":
        vmem_cap = min(vmem_cap, 64 * _MIB)
    vmem_limit = min(vmem_cap * 3 // 4, 128 * _MIB)
    # Leave ~16 MiB of headroom below the scoped limit for Mosaic internal
    # scratch / f32 temps the budget formula can't see.
    block_budget = max(8 * _MIB, vmem_limit - 16 * _MIB)
    return vmem_limit, block_budget, params["hbm_step_target"]


def _choose_block_rows(rows, hidden, in_dtype, out_dtype, block_budget,
                       hbm_step_target, gen):
    """Largest sublane-aligned row tile that fits VMEM and the HBM-step target."""
    in_b = jnp.dtype(in_dtype).itemsize
    out_b = jnp.dtype(out_dtype).itemsize
    # Sublane packing must satisfy BOTH the load tile and the store tile
    # (8 rows @32-bit, 16 @16-bit, 32 @8-bit).
    packing = 8 * max(1, 4 // in_b, 4 // out_b)
    # VMEM per row: double-buffered input + output blocks plus ~3 full-tile
    # f32 intermediates (x_f32, x*x, x*inv) the body materializes.
    per_row_vmem = hidden * (2 * in_b + 2 * out_b + 12)
    rows_vmem = block_budget // per_row_vmem
    # Per-step HBM traffic target (amortizes the ~0.35us per-step overhead
    # without making steps needlessly huge).
    per_row_hbm = hidden * (in_b + out_b)
    rows_hbm = max(1, hbm_step_target // per_row_hbm)
    block_rows = max(packing, min(rows_vmem, rows_hbm) // packing * packing)
    # Never make the block larger than the (padded) array.
    block_rows = min(block_rows, _round_up(rows, packing))
    # v7x has 2 TensorCores: keep >=2 grid steps and prefer an even step count
    # so both cores get equal work.  (v5e/v6e are single-TC: splitting small
    # inputs just shrinks DMAs for no gain, so skip it there.)
    if gen == "v7x" and rows > packing:
        block_rows = min(block_rows,
                         max(packing, _round_up(pl.cdiv(rows, 2), packing)))
        steps = pl.cdiv(rows, block_rows)
        if steps > 1 and steps % 2 == 1:
            block_rows = max(packing, _round_up(pl.cdiv(rows, steps + 1), packing))
    return block_rows


def rmsnorm(x, weight, eps=1e-6, *, block_rows=None, out_dtype=None):
    """RMSNorm over the last axis of x, gain `weight` of shape (hidden,).

    out_dtype defaults to promote_types(weight.dtype, x.dtype) for strict
    PyTorch parity.  Fast path for bf16 activations with an f32 gain: pass
    out_dtype=x.dtype to halve the HBM write traffic (~30% wall-clock on this
    memory-bound kernel); numerics differ only by the final narrowing cast.
    """
    orig_shape = x.shape
    hidden = orig_shape[-1]
    x2d = x.reshape(-1, hidden)          # contiguous last axis -> no copy
    rows = x2d.shape[0]

    compute_dtype = jnp.promote_types(weight.dtype, x.dtype)
    if out_dtype is None:
        out_dtype = compute_dtype

    gen = _tpu_generation()
    vmem_limit, block_budget, hbm_step_target = _vmem_params(gen)
    if block_rows is None:
        block_rows = _choose_block_rows(rows, hidden, x.dtype, out_dtype,
                                        block_budget, hbm_step_target, gen)

    # Pre-cast the gain once (exact widening) so the kernel's broadcast
    # multiply is a pure VPU op with no per-step convert.
    w2d = weight.astype(compute_dtype).reshape(1, hidden)

    # Ragged last block: Pallas drops out-of-range writes; the garbage rows it
    # computes are independent of the valid rows, so results are unaffected.
    grid = (pl.cdiv(rows, block_rows),)

    kernel = functools.partial(_rmsnorm_kernel, eps=eps)

    out2d = pl.pallas_call(
        kernel,
        out_shape=jax.ShapeDtypeStruct((rows, hidden), out_dtype),
        grid_spec=pltpu.PrefetchScalarGridSpec(
            num_scalar_prefetch=0,
            grid=grid,
            in_specs=[
                pl.BlockSpec((block_rows, hidden), lambda i: (i, 0)),
                # Tiny gain row: resident in VMEM, untiled, fetched once.
                pl.BlockSpec(memory_space=pltpu.MemorySpace.VMEM),
            ],
            out_specs=pl.BlockSpec((block_rows, hidden), lambda i: (i, 0)),
        ),
        compiler_params=pltpu.CompilerParams(
            dimension_semantics=("parallel",),
            vmem_limit_bytes=vmem_limit,
        ),
    )(x2d, w2d)

    return out2d.reshape(orig_shape)


def rmsnorm_ref(x, weight, eps=1e-6):
    xf = x.astype(jnp.float32)
    var = jnp.mean(xf * xf, axis=-1, keepdims=True)
    y = (xf * jax.lax.rsqrt(var + eps)).astype(x.dtype)
    return weight * y


if __name__ == "__main__":
    key0, key1, key2 = jax.random.split(jax.random.PRNGKey(0), 3)
    batch, seq, hidden = 2, 8, 32

    # Deterministic parameter init: RMSNorm weight = ones(hidden), as in __init__.
    weight = jnp.ones((hidden,), dtype=jnp.float32)

    # 1) f32 activations, torch-parity output dtype.
    x = jax.random.normal(key0, (batch, seq, hidden), dtype=jnp.float32)
    out = jax.block_until_ready(rmsnorm(x, weight, eps=1e-6))
    ref = rmsnorm_ref(x, weight, eps=1e-6)
    assert out.shape == x.shape
    assert out.dtype == ref.dtype
    assert jnp.allclose(out, ref, atol=1e-5, rtol=1e-5), "mismatch vs reference"

    # 2) Ragged row count (rows % block_rows != 0) exercises the pl.cdiv grid +
    #    dropped-write partial last block path.
    x2 = jax.random.normal(key1, (3, 5, hidden), dtype=jnp.float32)
    out2 = jax.block_until_ready(rmsnorm(x2, weight, eps=1e-6))
    ref2 = rmsnorm_ref(x2, weight, eps=1e-6)
    assert out2.shape == x2.shape
    assert jnp.allclose(out2, ref2, atol=1e-5, rtol=1e-5), "ragged mismatch vs reference"

    # 3) bf16 activations with the documented narrow-output fast path.
    x3 = jax.random.normal(key2, (batch, seq, hidden), dtype=jnp.float32).astype(jnp.bfloat16)
    out3 = jax.block_until_ready(rmsnorm(x3, weight, eps=1e-6, out_dtype=x3.dtype))
    ref3 = rmsnorm_ref(x3, weight, eps=1e-6)           # f32 (torch promotion)
    assert out3.dtype == jnp.bfloat16
    assert jnp.allclose(out3.astype(jnp.float32), ref3, atol=3e-2, rtol=3e-2), \
        "bf16 fast-path mismatch vs reference"

    print("KERNEL_OK")
</pallas_src>

<mosaic_0001>
module attributes {stable_mosaic.version = 11 : i64} {
  func.func @_rmsnorm_kernel(%arg0: i32, %arg1: memref<16x32xf32, #tpu.memory_space<vmem>>, %arg2: memref<1x32xf32, #tpu.memory_space<vmem>>, %arg3: memref<16x32xf32, #tpu.memory_space<vmem>>) attributes {dimension_semantics = [#tpu.dimension_semantics<parallel>], iteration_bounds = array<i64: 1>, scalar_prefetch = 0 : i64, scratch_operands = 0 : i64, tpu.core_type = #tpu.core_type<tc>, window_params = [{transform_indices = @transform_0, window_bounds = array<i64: 16, 32>}, {pipeline_mode = #tpu.pipeline_mode<synchronous>, transform_indices = @transform_1, window_bounds = array<i64: 1, 32>}, {transform_indices = @transform_2, window_bounds = array<i64: 16, 32>}]} {
    %c0 = arith.constant 0 : index
    %c0_0 = arith.constant 0 : index
    %0 = vector.load %arg1[%c0, %c0_0] : memref<16x32xf32, #tpu.memory_space<vmem>>, vector<16x32xf32>
    %1 = arith.mulf %0, %0 : vector<16x32xf32>
    %cst = arith.constant dense<0.000000e+00> : vector<16xf32>
    %2 = vector.multi_reduction <add>, %1, %cst [1] : vector<16x32xf32> to vector<16xf32>
    %3 = vector.shape_cast %2 : vector<16xf32> to vector<16x1xf32>
    %cst_1 = arith.constant 3.200000e+01 : f32
    %4 = vector.broadcast %cst_1 : f32 to vector<16x1xf32>
    %5 = arith.divf %3, %4 : vector<16x1xf32>
    %cst_2 = arith.constant 9.99999997E-7 : f32
    %6 = vector.broadcast %cst_2 : f32 to vector<16x1xf32>
    %7 = arith.addf %5, %6 : vector<16x1xf32>
    %8 = math.rsqrt %7 : vector<16x1xf32>
    %9 = vector.broadcast %8 : vector<16x1xf32> to vector<16x32xf32>
    %10 = arith.mulf %0, %9 : vector<16x32xf32>
    %c0_3 = arith.constant 0 : index
    %c0_4 = arith.constant 0 : index
    %11 = vector.load %arg2[%c0_3, %c0_4] : memref<1x32xf32, #tpu.memory_space<vmem>>, vector<1x32xf32>
    %12 = vector.broadcast %11 : vector<1x32xf32> to vector<16x32xf32>
    %13 = arith.mulf %12, %10 : vector<16x32xf32>
    %c0_5 = arith.constant 0 : index
    %c0_6 = arith.constant 0 : index
    %14 = vector.load %arg3[%c0_5, %c0_6] : memref<16x32xf32, #tpu.memory_space<vmem>>, vector<16x32xf32>
    tpu.vector_store %arg3[%c0_5, %c0_6], %13 {strides = array<i32>} : memref<16x32xf32, #tpu.memory_space<vmem>>, vector<16x32xf32>,
    return
  }
  func.func @transform_0(%arg0: i32) -> (i32, i32) {
    %c0_i32 = arith.constant 0 : i32
    %c0_i32_0 = arith.constant 0 : i32
    return %arg0, %c0_i32 : i32, i32
  }
  func.func @transform_1(%arg0: i32) -> (i32, i32) {
    %c0_i32 = arith.constant 0 : i32
    %c0_i32_0 = arith.constant 0 : i32
    %c0_i32_1 = arith.constant 0 : i32
    return %c0_i32, %c0_i32_0 : i32, i32
  }
  func.func @transform_2(%arg0: i32) -> (i32, i32) {
    %c0_i32 = arith.constant 0 : i32
    %c0_i32_0 = arith.constant 0 : i32
    return %arg0, %c0_i32 : i32, i32
  }
}

</mosaic_0001>

<llo_original>
// kernel: tpu_custom_call.1
$region0: #{tpu_custom_call.1}
  #allocation0 [shape = 'u32[]', space=smem, size = 0x4, offset = 0x4, fixed_abs, tag = 'smem constant byte address 0x4 - core index']
  #allocation1 [shape = 'u32[144,128]{1,0:T(1,128)}', space=vmem, size = 0x12000, scoped, tag = 'internal scratch']
  %s0 = inlined_call_operand.hbm [shape: f32[16,32], index: 0, kind: input, shape index: {}]
  %s1 = inlined_call_operand.vmem [shape: f32[1,32], index: 1, kind: input, shape index: {}]
  %s2 = inlined_call_operand.hbm [shape: f32[16,32], index: 2, kind: output, shape index: {}]
  %s3 = sld [smem:[#allocation0]]
  $region22: #{tpu_custom_call.1} parent=0
    _
  %s5 = ssub.s32 1, %s3
  %s6 = scalar_select 0, %s5, %s3
  $region1: #{tpu_custom_call.1} parent=0
    #allocation2 [shape = 'u8[8192]{0}', space=vmem, size = 0x2000, scoped, tag = 'input window, operand 0, single buffered']
    #allocation3 [shape = 's32[1]{0}', space=sflag, size = 0x4, scoped, tag = 'scoped memory for tpu_custom_call.1']
    #allocation4 [shape = 's32[1]{0}', space=sflag, size = 0x4, scoped, tag = 'scoped memory for tpu_custom_call.1']
    #allocation5 [shape = 'u8[8192]{0}', space=vmem, size = 0x2000, scoped, tag = 'output window, operand 0, single buffered']
    %7 = vsyncpa [#allocation3], 0
    %8 = vsyncpa [#allocation4], 0
    // Predicated region
    $region2: #{tpu_custom_call.1} parent=1 // pred_check
      _
    $region3: #{tpu_custom_call.1} parent=1 // pred_check_branch
      %10 = sbr.rel (0) target = $region5
    $region4: #{tpu_custom_call.1} parent=1 // pred_region
      %s12 = ssub.s32 256, 256
      %13 = vsyncadd [#allocation3], %s12
      %s14 = sshll.u32 [#allocation2], 4
      %s15 = int_to_ptr.vmem [resolvable:$true] %s14
      %20 = dma.hbm_to_vmem [thread:$0]  %s0, 256, %s15, [#allocation3], 128, 128, 8
    $region5: #{tpu_custom_call.1} parent=1 // pred_fallthru
      _
    // Predicated region
    $region6: #{tpu_custom_call.1} parent=1 // pred_check
      _
    $region7: #{tpu_custom_call.1} parent=1 // pred_check_branch
      %22 = sbr.rel (0) target = $region9
    $region8: #{tpu_custom_call.1} parent=1 // pred_region
      _
    $region9: #{tpu_custom_call.1} parent=1 // pred_fallthru
      _
    // Predicated region
    $region10: #{tpu_custom_call.1} parent=1 // pred_check
      _
    $region11: #{tpu_custom_call.1} parent=1 // pred_check_branch
      %24 = sbr.rel (0) target = $region13
    $region12: #{tpu_custom_call.1} parent=1 // pred_region
      %25 = dma.done [#allocation3], 256
    $region13: #{tpu_custom_call.1} parent=1 // pred_fallthru
      _
    %v26 = vld [vmem:[#allocation2] sm:$0xff]
    %v27 = vld [vmem:[#allocation2 + $0x8] sm:$0xff]
    %v28 = vmul.f32 %v26, %v26
    %v29 = vmul.f32 %v27, %v27
    %vm30 = vcmask 261120
    %v31 = vsel %vm30, %v28, 0.0
    %32 = vadd.xlane.f32.xlu0 %v31
    %v33 = vpop.xlane.xlu0 %32
    %v34 = vsel %vm30, %v29, 0.0
    %35 = vadd.xlane.f32.xlu0 %v34
    %v36 = vpop.xlane.xlu0 %35
    %v37 = vrcp.pop 32.0
    %v38 = vmul.f32 %v33, %v37
    %v39 = vmul.f32 %v36, %v37
    %v40 = vadd.f32 %v38, 1e-06
    %v41 = vadd.f32 %v39, 1e-06
    %v42 = vrsqrt.pop %v40
    %v43 = vrsqrt.pop %v41
    %v44 = vmul.f32 %v26, %v42
    %v45 = vmul.f32 %v27, %v43
    %v46 = vld [vmem:[%s1] sm:$0x1]
    %v48 = vlaneseq
    %v49 = vshrl.u32 %v48, 7
    %v50 = vsub.s32 0, %v49
    %v51 = vrot.slane %v46, %v50
    %v53 = vmul.f32 %v51, %v44
    %v54 = vmul.f32 %v51, %v45
    %55 = vst.msk [vmem:[#allocation5] sm:$0xff] %vm30, %v53
    %56 = vst.msk [vmem:[#allocation5 + $0x8] sm:$0xff] %vm30, %v54
    // Predicated region
    $region14: #{tpu_custom_call.1} parent=1 // pred_check
      _
    $region15: #{tpu_custom_call.1} parent=1 // pred_check_branch
      %58 = sbr.rel (0) target = $region17
    $region16: #{tpu_custom_call.1} parent=1 // pred_region
      %s60 = ssub.s32 256, 256
      %61 = vsyncadd [#allocation4], %s60
      %s62 = sshll.u32 [#allocation5], 4
      %s63 = int_to_ptr.vmem [resolvable:$true] %s62
      %68 = dma.vmem_to_hbm [thread:$0]  %s63, 256, %s2, [#allocation4], 128, 128, 8
    $region17: #{tpu_custom_call.1} parent=1 // pred_fallthru
      _
    // Predicated region
    $region18: #{tpu_custom_call.1} parent=1 // pred_check
      _
    $region19: #{tpu_custom_call.1} parent=1 // pred_check_branch
      %70 = sbr.rel (0) target = $region21
    $region20: #{tpu_custom_call.1} parent=1 // pred_region
      %71 = dma.done [#allocation4], 256
    $region21: #{tpu_custom_call.1} parent=1 // pred_fallthru
      _
    %72 = vsyncpa [#allocation3], 1
    %73 = vsyncpa [#allocation4], 1

</llo_original>
